<compile_context>
chip_gen: v7x
topology: tpu7x:2x2x1
jax: 0.10.0
libtpu: 0.0.40
codegen_flags: <defaults>
</compile_context>

<pallas_src>
import functools

import jax
import jax.numpy as jnp
import numpy as np
from jax.experimental import pallas as pl
from jax.experimental.pallas import tpu as pltpu

_LANE_WIDTHS = (2048, 1024, 512, 256, 128)   # candidate lane-dense slab widths
_TARGET_TILE_ELEMS = 1 << 20                 # ~1M elems/tile (4 MiB f32 out)
_VMEM_LIMIT_BYTES = 48 * 1024 * 1024         # headroom on v5e/v6e; < v7x 64 MiB


def _cast_kernel(x_ref, o_ref):
    # Float / bool path: plain cast, no scaling (no wasted VALU op).
    o_ref[...] = x_ref[...].astype(jnp.float32)


def _cast_scale_kernel(x_ref, o_ref, *, max_val):
    # Integer path: cast then divide by the dtype max, matching torchvision's
    # convert_image_dtype (division, not multiply-by-reciprocal, for bit match).
    o_ref[...] = x_ref[...].astype(jnp.float32) / jnp.float32(max_val)


def _int_max(dtype):
    """Return the integer-dtype max for scaling, or None for plain cast."""
    dtype = jnp.dtype(dtype)
    if dtype == jnp.bool_:
        return None  # explicit: bool -> 0.0 / 1.0 cast (matches torchvision)
    if jnp.issubdtype(dtype, jnp.integer):
        return float(jnp.iinfo(dtype).max)
    return None      # floating dtypes -> plain cast


def _pick_row_tile(rows, width):
    """Largest sublane-aligned row tile that divides `rows` and keeps the tile
    near _TARGET_TILE_ELEMS elements. Returns None if no aligned divisor exists."""
    target_rows = max(8, _TARGET_TILE_ELEMS // width)
    if rows <= target_rows:
        # Whole slab fits in one tile. Split in two when cheap so a v7x
        # megacore can shard the parallel grid axis across both TensorCores.
        if rows % 16 == 0 and rows >= 16:
            return rows // 2
        return rows
    # Prefer 32-row-aligned tiles (native packed tile for int8/bf16), then 8.
    for align in (32, 8):
        r = (target_rows // align) * align
        while r >= align:
            if rows % r == 0:
                return r
            r -= align
    return None


def _run(x2d, max_val, row_tile):
    rows, width = x2d.shape
    grid = (rows // row_tile,)
    if max_val is None:
        kernel = _cast_kernel
    else:
        kernel = functools.partial(_cast_scale_kernel, max_val=max_val)
    return pl.pallas_call(
        kernel,
        out_shape=jax.ShapeDtypeStruct((rows, width), jnp.float32),
        grid_spec=pltpu.PrefetchScalarGridSpec(
            num_scalar_prefetch=0,
            grid=grid,
            in_specs=[pl.BlockSpec((row_tile, width), lambda i: (i, 0))],
            out_specs=pl.BlockSpec((row_tile, width), lambda i: (i, 0)),
        ),
        compiler_params=pltpu.CompilerParams(
            dimension_semantics=("parallel",),
            vmem_limit_bytes=_VMEM_LIMIT_BYTES,
        ),
    )(x2d)


def to_float32_dtype(x: jax.Array) -> jax.Array:
    """Pallas equivalent of ToFloat32DType.forward(x)."""
    orig_shape = x.shape

    # float32 input: ConvertDtype is the identity — skip the HBM round trip.
    if x.dtype == jnp.float32:
        return x

    total = int(np.prod(orig_shape)) if orig_shape else 1
    if total == 0:
        return jnp.zeros(orig_shape, jnp.float32)

    max_val = _int_max(x.dtype)
    x_flat = x.reshape((total,))

    # Pass 1 (fast path, no pad/slice copies): widest lane-dense slab whose
    # element count divides exactly and whose row count is sublane-aligned.
    for width in _LANE_WIDTHS:
        if total % width:
            continue
        rows = total // width
        if rows % 8:
            continue
        row_tile = _pick_row_tile(rows, width)
        if row_tile is not None:
            out2d = _run(x_flat.reshape((rows, width)), max_val, row_tile)
            return out2d.reshape(orig_shape)

    # Pass 2: exact-dividing slab with a short, non-8-aligned row count; the
    # whole slab is one full-extent block (small tensors only).
    for width in _LANE_WIDTHS:
        if total % width:
            continue
        rows = total // width
        if rows <= max(8, _TARGET_TILE_ELEMS // width):
            out2d = _run(x_flat.reshape((rows, width)), max_val, rows)
            return out2d.reshape(orig_shape)

    # Fallback (element count not divisible by 128 — rare for image/video
    # tensors): pad the flat slab up to an (8, 512)-aligned row count. This is
    # the only path that incurs an extra pad + slice HBM pass.
    width = 512
    rows = ((-(-total // width)) + 7) // 8 * 8          # ceil to multiple of 8
    row_tile = _pick_row_tile(rows, width)              # rows % 8 == 0 -> not None
    padded = rows * width
    x_pad = jnp.pad(x_flat, (0, padded - total))
    out2d = _run(x_pad.reshape((rows, width)), max_val, row_tile)
    return out2d.reshape((padded,))[:total].reshape(orig_shape)


if __name__ == "__main__":
    key = jax.random.PRNGKey(0)

    # Typical video-transform input: uint8 frames in NCHW.
    B, C, H, W = 2, 4, 16, 16
    x_u8 = jax.random.randint(key, (B, C, H, W), 0, 256, dtype=jnp.int32).astype(
        jnp.uint8
    )

    y = to_float32_dtype(x_u8)
    jax.block_until_ready(y)

    # Reference check: uint8 -> float32 scaled by /255.
    ref = x_u8.astype(jnp.float32) / 255.0
    assert y.dtype == jnp.float32
    assert y.shape == (B, C, H, W)
    np.testing.assert_allclose(np.asarray(y), np.asarray(ref), rtol=1e-6, atol=1e-6)

    # Float-input path (pure cast, no scaling).
    x_bf16 = jax.random.normal(jax.random.PRNGKey(1), (B, C, H, W), dtype=jnp.bfloat16)
    y2 = to_float32_dtype(x_bf16)
    jax.block_until_ready(y2)
    np.testing.assert_allclose(
        np.asarray(y2), np.asarray(x_bf16.astype(jnp.float32)), rtol=0, atol=0
    )

    # Larger, realistic frame batch to exercise the multi-tile / parallel grid.
    x_big = jax.random.randint(
        jax.random.PRNGKey(2), (8, 3, 224, 224), 0, 256, dtype=jnp.int32
    ).astype(jnp.uint8)
    y3 = to_float32_dtype(x_big)
    jax.block_until_ready(y3)
    np.testing.assert_allclose(
        np.asarray(y3), np.asarray(x_big).astype(np.float32) / 255.0,
        rtol=1e-6, atol=1e-6,
    )

    print("KERNEL_OK")
</pallas_src>

<mosaic_0001>
module attributes {stable_mosaic.version = 11 : i64} {
  func.func @_cast_scale_kernel(%arg0: i32, %arg1: memref<8x256xi8, #tpu.memory_space<vmem>>, %arg2: memref<8x256xf32, #tpu.memory_space<vmem>>) attributes {dimension_semantics = [#tpu.dimension_semantics<parallel>], iteration_bounds = array<i64: 1>, scalar_prefetch = 0 : i64, scratch_operands = 0 : i64, tpu.core_type = #tpu.core_type<tc>, window_params = [{transform_indices = @transform_0, window_bounds = array<i64: 8, 256>}, {transform_indices = @transform_1, window_bounds = array<i64: 8, 256>}]} {
    %c0 = arith.constant 0 : index
    %c0_0 = arith.constant 0 : index
    %0 = vector.load %arg1[%c0, %c0_0] : memref<8x256xi8, #tpu.memory_space<vmem>>, vector<8x256xi8>
    %1 = arith.uitofp %0 : vector<8x256xi8> to vector<8x256xf32>
    %cst = arith.constant 2.550000e+02 : f32
    %2 = vector.broadcast %cst : f32 to vector<8x256xf32>
    %3 = arith.divf %1, %2 : vector<8x256xf32>
    %c0_1 = arith.constant 0 : index
    %c0_2 = arith.constant 0 : index
    %4 = vector.load %arg2[%c0_1, %c0_2] : memref<8x256xf32, #tpu.memory_space<vmem>>, vector<8x256xf32>
    tpu.vector_store %arg2[%c0_1, %c0_2], %3 {strides = array<i32>} : memref<8x256xf32, #tpu.memory_space<vmem>>, vector<8x256xf32>,
    return
  }
  func.func @transform_0(%arg0: i32) -> (i32, i32) {
    %c0_i32 = arith.constant 0 : i32
    %c0_i32_0 = arith.constant 0 : i32
    return %arg0, %c0_i32 : i32, i32
  }
  func.func @transform_1(%arg0: i32) -> (i32, i32) {
    %c0_i32 = arith.constant 0 : i32
    %c0_i32_0 = arith.constant 0 : i32
    return %arg0, %c0_i32 : i32, i32
  }
}

</mosaic_0001>

<llo_original>
// kernel: tpu_custom_call.1
$region0: #{tpu_custom_call.1}
  #allocation0 [shape = 'u32[]', space=smem, size = 0x4, offset = 0x4, fixed_abs, tag = 'smem constant byte address 0x4 - core index']
  #allocation1 [shape = 'u32[144,128]{1,0:T(1,128)}', space=vmem, size = 0x12000, scoped, tag = 'internal scratch']
  %s0 = inlined_call_operand.hbm [shape: u8[8,256], index: 0, kind: input, shape index: {}]
  %s1 = inlined_call_operand.hbm [shape: f32[8,256], index: 1, kind: output, shape index: {}]
  %s2 = sld [smem:[#allocation0]]
  $region18: #{tpu_custom_call.1} parent=0
    _
  %s4 = ssub.s32 1, %s2
  %s5 = scalar_select 0, %s4, %s2
  $region1: #{tpu_custom_call.1} parent=0
    #allocation2 [shape = 'u8[2048]{0}', space=vmem, size = 0x800, scoped, tag = 'input window, operand 0, single buffered']
    #allocation3 [shape = 's32[1]{0}', space=sflag, size = 0x4, scoped, tag = 'scoped memory for tpu_custom_call.1']
    #allocation4 [shape = 's32[1]{0}', space=sflag, size = 0x4, scoped, tag = 'scoped memory for tpu_custom_call.1']
    #allocation5 [shape = 'u8[8192]{0}', space=vmem, size = 0x2000, scoped, tag = 'output window, operand 0, single buffered']
    %6 = vsyncpa [#allocation3], 0
    %7 = vsyncpa [#allocation4], 0
    // Predicated region
    $region2: #{tpu_custom_call.1} parent=1 // pred_check
      _
    $region3: #{tpu_custom_call.1} parent=1 // pred_check_branch
      %9 = sbr.rel (0) target = $region5
    $region4: #{tpu_custom_call.1} parent=1 // pred_region
      %s11 = ssub.s32 64, 64
      %12 = vsyncadd [#allocation3], %s11
      %s14 = sshll.u32 [#allocation2], 4
      %s15 = int_to_ptr.vmem [resolvable:$true] %s14
      %17 = dma.hbm_to_vmem [thread:$0]  %s0, 64, %s15, [#allocation3]
    $region5: #{tpu_custom_call.1} parent=1 // pred_fallthru
      _
    // Predicated region
    $region6: #{tpu_custom_call.1} parent=1 // pred_check
      _
    $region7: #{tpu_custom_call.1} parent=1 // pred_check_branch
      %19 = sbr.rel (0) target = $region9
    $region8: #{tpu_custom_call.1} parent=1 // pred_region
      %20 = dma.done [#allocation3], 64
    $region9: #{tpu_custom_call.1} parent=1 // pred_fallthru
      _
    %v21 = vld [vmem:[#allocation2] sm:$0xf]
    %v22 = vunpack.c.0.s8 %v21
    %v23 = vunpack.c.1.s8 %v21
    %v24 = vand.u32 %v22, 255
    %v25 = vand.u32 %v23, 255
    %v26 = vcvt.s32.f32 %v24
    %v27 = vcvt.s32.f32 %v25
    %v28 = vrcp.pop 255.0
    %v29 = vmul.f32 %v26, %v28
    %v30 = vmul.f32 %v27, %v28
    %31 = vst [vmem:[#allocation5] sm:$0xff] %v29
    %32 = vst [vmem:[#allocation5 + $0x8] sm:$0xff] %v30
    // Predicated region
    $region10: #{tpu_custom_call.1} parent=1 // pred_check
      _
    $region11: #{tpu_custom_call.1} parent=1 // pred_check_branch
      %34 = sbr.rel (0) target = $region13
    $region12: #{tpu_custom_call.1} parent=1 // pred_region
      %s36 = ssub.s32 256, 256
      %37 = vsyncadd [#allocation4], %s36
      %s39 = sshll.u32 [#allocation5], 4
      %s40 = int_to_ptr.vmem [resolvable:$true] %s39
      %42 = dma.vmem_to_hbm [thread:$0]  %s40, 256, %s1, [#allocation4]
    $region13: #{tpu_custom_call.1} parent=1 // pred_fallthru
      _
    // Predicated region
    $region14: #{tpu_custom_call.1} parent=1 // pred_check
      _
    $region15: #{tpu_custom_call.1} parent=1 // pred_check_branch
      %44 = sbr.rel (0) target = $region17
    $region16: #{tpu_custom_call.1} parent=1 // pred_region
      %45 = dma.done [#allocation4], 256
    $region17: #{tpu_custom_call.1} parent=1 // pred_fallthru
      _
    %46 = vsyncpa [#allocation3], 1
    %47 = vsyncpa [#allocation4], 1

</llo_original>
